<compile_context>
chip_gen: v6e
topology: v6e:2x2x1
jax: 0.10.0
libtpu: 0.0.40
codegen_flags: <defaults>
</compile_context>

<pallas_src>
import jax
import jax.numpy as jnp
from jax.experimental import pallas as pl
from jax.experimental.pallas import tpu as pltpu


def _round_up(x, m):
    return ((x + m - 1) // m) * m


def _linear_logsoftmax_kernel(x_ref, w_ref, b_ref, o_ref, m_sc, l_sc):
    """One (batch tile i, class tile j) grid step.

    x_ref: (Bt, D)        batch tile (resident across the class sweep)
    w_ref: (D, Ct)        streamed weight chunk
    b_ref: (1, Ct)        streamed bias chunk (f32; padded cols = -1e30)
    o_ref: (nc, Bt, Ct)   output block, resident (revisited) across the sweep
    m_sc:  (Bt, 1) f32    running row max
    l_sc:  (Bt, 1) f32    running row sum(exp(logits - m))
    """
    j = pl.program_id(1)

    @pl.when(j == 0)
    def _init():
        m_sc[...] = jnp.full_like(m_sc, -jnp.inf)
        l_sc[...] = jnp.zeros_like(l_sc)

    # Linear on the MXU; f32 accumulation regardless of operand dtype.
    chunk = jnp.dot(x_ref[...], w_ref[...], preferred_element_type=jnp.float32)
    chunk = chunk + b_ref[...]                       # (Bt, Ct), f32

    # Stash the raw logits of this class tile; normalized in the finalize.
    o_ref[j] = chunk.astype(o_ref.dtype)

    # Online (max, sum-exp) update along the class axis.
    m_prev = m_sc[...]
    m_new = jnp.maximum(m_prev, jnp.max(chunk, axis=1, keepdims=True))
    l_sc[...] = (l_sc[...] * jnp.exp(m_prev - m_new)
                 + jnp.sum(jnp.exp(chunk - m_new), axis=1, keepdims=True))
    m_sc[...] = m_new

    @pl.when(j == pl.num_programs(1) - 1)
    def _finalize():
        norm = m_sc[...] + jnp.log(l_sc[...])        # (Bt, 1)
        # Normalize one (Bt, Ct) tile at a time to bound vreg pressure.
        for t in range(o_ref.shape[0]):
            o_ref[t] = (o_ref[t].astype(jnp.float32) - norm).astype(o_ref.dtype)


def prepare_linear_logsoftmax_params(weight, bias, *, class_tile=512,
                                     mxu_dtype=None):
    """Call-invariant parameter prep (do this ONCE, not per call).

    weight: (C, D) PyTorch nn.Linear layout, bias: (C,).
    Returns (w_t, b_p, nclass, Ct): w_t is (D, Cp) in mxu_dtype (or weight
    dtype), b_p is (1, Cp) f32.  Padded class columns get zero weight and a
    -1e30 bias so exp() underflows to 0 and they never win the row max.
    """
    C, D = weight.shape
    class_tile = _round_up(max(class_tile, 128), 128)
    Cp0 = _round_up(max(C, 1), 128)
    Ct = Cp0 if Cp0 <= class_tile else class_tile
    Cp = _round_up(Cp0, Ct)

    w_dtype = weight.dtype if mxu_dtype is None else mxu_dtype
    w_t = jnp.zeros((D, Cp), w_dtype).at[:, :C].set(weight.T.astype(w_dtype))
    b_p = jnp.full((1, Cp), -1e30, dtype=jnp.float32).at[0, :C].set(
        bias.astype(jnp.float32))
    return w_t, b_p, C, Ct


def linear_logsoftmax_prepared(x, w_t, b_p, nclass, class_tile_eff, *,
                               batch_tile=256, out_dtype=jnp.float32):
    """x: (B, D) with prepared params. Returns log_softmax(x W^T + b, axis=1)."""
    B, D = x.shape
    D2, Cp = w_t.shape
    assert D == D2
    Ct = class_tile_eff
    assert Cp % Ct == 0
    nc = Cp // Ct

    # Feed the MXU in the weight's storage dtype (bf16 recommended: native
    # bf16 MXUs on v5e/v6e/v7x; accumulation stays f32 inside the kernel).
    x = x.astype(w_t.dtype)

    # Batch tiling (sublane multiple of 8).  When the whole batch fits in one
    # tile, still split into >= 2 tiles so the "parallel" batch axis can shard
    # across v7x's two TensorCores.
    if B <= batch_tile:
        Bt = max(8, _round_up((B + 1) // 2, 8))
    else:
        Bt = _round_up(batch_tile, 8)
    Bp = _round_up(B, Bt)
    nb = Bp // Bt
    x_p = x if Bp == B else jnp.zeros((Bp, D), x.dtype).at[:B, :].set(x)

    x_bytes = x_p.dtype.itemsize
    w_bytes = w_t.dtype.itemsize
    o_bytes = jnp.dtype(out_dtype).itemsize

    # Scoped VMEM: double-buffered x tile, weight chunk, bias chunk, output
    # block, plus the tiny (Bt,1) scratches; 25% headroom, clamped to
    # [32 MiB, 56 MiB] (safe on v7x's 64 MiB physical VMEM).
    vmem_needed = (2 * Bt * D * x_bytes
                   + 2 * D * Ct * w_bytes
                   + 2 * Ct * 4
                   + 2 * nc * Bt * Ct * o_bytes
                   + 4 * Bt * 4)
    vmem_limit = int(min(max(vmem_needed * 5 // 4, 32 * 1024 * 1024),
                         56 * 1024 * 1024))

    out3 = pl.pallas_call(
        _linear_logsoftmax_kernel,
        out_shape=jax.ShapeDtypeStruct((nc, Bp, Ct), out_dtype),
        grid_spec=pltpu.PrefetchScalarGridSpec(
            num_scalar_prefetch=0,
            grid=(nb, nc),                                    # class axis innermost
            in_specs=[
                pl.BlockSpec((Bt, D), lambda i, j: (i, 0)),   # x: per batch tile
                pl.BlockSpec((D, Ct), lambda i, j: (0, j)),   # weight: streamed
                pl.BlockSpec((1, Ct), lambda i, j: (0, j)),   # bias: streamed
            ],
            # Output block resident across the class sweep; written back once
            # per batch tile (lane-dense, Ct a multiple of 128).
            out_specs=pl.BlockSpec((nc, Bt, Ct), lambda i, j: (0, i, 0)),
            scratch_shapes=[pltpu.VMEM((Bt, 1), jnp.float32),   # running max
                            pltpu.VMEM((Bt, 1), jnp.float32)],  # running sum
        ),
        compiler_params=pltpu.CompilerParams(
            dimension_semantics=("parallel", "arbitrary"),
            vmem_limit_bytes=vmem_limit),
        cost_estimate=pl.CostEstimate(
            flops=2 * Bp * Cp * D,
            transcendentals=Bp * Cp + Bp * (nc + 1),
            bytes_accessed=(Bp * D * x_bytes + D * Cp * w_bytes + Cp * 4
                            + nc * Bp * Ct * o_bytes)),
    )(x_p, w_t, b_p)

    # (nc, Bp, Ct) -> (Bp, Cp); a free reshape when nc == 1.
    out = jnp.transpose(out3, (1, 0, 2)).reshape(Bp, Cp)
    return out[:B, :nclass]


def linear_logsoftmax(x, weight, bias, *, batch_tile=256, class_tile=512,
                      mxu_dtype=None, out_dtype=jnp.float32):
    """Convenience wrapper: param prep (cache this in real use) + kernel."""
    params = prepare_linear_logsoftmax_params(
        weight, bias, class_tile=class_tile, mxu_dtype=mxu_dtype)
    return linear_logsoftmax_prepared(
        x, *params, batch_tile=batch_tile, out_dtype=out_dtype)


def reference(x, weight, bias):
    logits = x.astype(jnp.float32) @ weight.T.astype(jnp.float32) + bias
    return jax.nn.log_softmax(logits, axis=1)


if __name__ == "__main__":
    key = jax.random.PRNGKey(0)
    batch, input_dim, nclass = 64, 32, 16

    kx, kw, kb = jax.random.split(key, 3)
    x = jax.random.normal(kx, (batch, input_dim), dtype=jnp.float32)
    # Deterministic init mimicking nn.Linear default (uniform in +-1/sqrt(fan_in)).
    bound = 1.0 / jnp.sqrt(input_dim)
    weight = jax.random.uniform(kw, (nclass, input_dim), dtype=jnp.float32,
                                minval=-bound, maxval=bound)
    bias = jax.random.uniform(kb, (nclass,), dtype=jnp.float32,
                              minval=-bound, maxval=bound)

    # 1) Default f32 path (single class tile, 2 batch tiles -> pipelined grid).
    out = jax.block_until_ready(linear_logsoftmax(x, weight, bias))
    ref = reference(x, weight, bias)
    assert out.shape == (batch, nclass)
    assert jnp.allclose(out, ref, atol=1e-4, rtol=1e-5)

    # 2) Class-streaming path (nclass > class_tile -> 2 class tiles, online
    #    (max, sum-exp) + finalize + tile-major unpack in the wrapper).
    nclass2 = 200
    kw2, kb2 = jax.random.split(kw)
    weight2 = jax.random.uniform(kw2, (nclass2, input_dim), dtype=jnp.float32,
                                 minval=-bound, maxval=bound)
    bias2 = jax.random.uniform(kb2, (nclass2,), dtype=jnp.float32,
                               minval=-bound, maxval=bound)
    out2 = jax.block_until_ready(
        linear_logsoftmax(x, weight2, bias2, class_tile=128))
    ref2 = reference(x, weight2, bias2)
    assert out2.shape == (batch, nclass2)
    assert jnp.allclose(out2, ref2, atol=1e-4, rtol=1e-5)

    # 3) bf16 MXU feed (f32 accumulate), looser tolerance.
    out_bf16 = jax.block_until_ready(
        linear_logsoftmax(x, weight, bias, mxu_dtype=jnp.bfloat16))
    assert jnp.allclose(out_bf16, ref, atol=5e-2, rtol=5e-2)

    print("KERNEL_OK")
</pallas_src>

<mosaic_0001>
module attributes {stable_mosaic.version = 11 : i64} {
  func.func @_linear_logsoftmax_kernel(%arg0: i32, %arg1: i32, %arg2: memref<32x32xf32, #tpu.memory_space<vmem>>, %arg3: memref<32x128xf32, #tpu.memory_space<vmem>>, %arg4: memref<1x128xf32, #tpu.memory_space<vmem>>, %arg5: memref<1x32x128xf32, #tpu.memory_space<vmem>>, %arg6: memref<32x1xf32, #tpu.memory_space<vmem>>, %arg7: memref<32x1xf32, #tpu.memory_space<vmem>>) attributes {dimension_semantics = [#tpu.dimension_semantics<parallel>, #tpu.dimension_semantics<arbitrary>], iteration_bounds = array<i64: 2, 1>, scalar_prefetch = 0 : i64, scratch_operands = 2 : i64, tpu.core_type = #tpu.core_type<tc>, window_params = [{transform_indices = @transform_0, window_bounds = array<i64: 32, 32>}, {transform_indices = @transform_1, window_bounds = array<i64: 32, 128>}, {transform_indices = @transform_2, window_bounds = array<i64: 1, 128>}, {transform_indices = @transform_3, window_bounds = array<i64: 1, 32, 128>}]} {
    %c0_i32 = arith.constant 0 : i32
    %0 = arith.cmpi eq, %arg1, %c0_i32 : i32
    %1 = arith.extui %0 : i1 to i32
    %c0_i32_0 = arith.constant 0 : i32
    %2 = arith.cmpi ne, %1, %c0_i32_0 : i32
    scf.if %2 {
      %cst_20 = arith.constant 0xFF800000 : f32
      %32 = vector.broadcast %cst_20 : f32 to vector<32x1xf32>
      %c0_21 = arith.constant 0 : index
      %c0_22 = arith.constant 0 : index
      %33 = vector.load %arg6[%c0_21, %c0_22] : memref<32x1xf32, #tpu.memory_space<vmem>>, vector<32x1xf32>
      tpu.vector_store %arg6[%c0_21, %c0_22], %32 {strides = array<i32>} : memref<32x1xf32, #tpu.memory_space<vmem>>, vector<32x1xf32>,
      %cst_23 = arith.constant 0.000000e+00 : f32
      %34 = vector.broadcast %cst_23 : f32 to vector<32x1xf32>
      %c0_24 = arith.constant 0 : index
      %c0_25 = arith.constant 0 : index
      %35 = vector.load %arg7[%c0_24, %c0_25] : memref<32x1xf32, #tpu.memory_space<vmem>>, vector<32x1xf32>
      tpu.vector_store %arg7[%c0_24, %c0_25], %34 {strides = array<i32>} : memref<32x1xf32, #tpu.memory_space<vmem>>, vector<32x1xf32>,
    } else {
    }
    %c0 = arith.constant 0 : index
    %c0_1 = arith.constant 0 : index
    %3 = vector.load %arg2[%c0, %c0_1] : memref<32x32xf32, #tpu.memory_space<vmem>>, vector<32x32xf32>
    %c0_2 = arith.constant 0 : index
    %c0_3 = arith.constant 0 : index
    %4 = vector.load %arg3[%c0_2, %c0_3] : memref<32x128xf32, #tpu.memory_space<vmem>>, vector<32x128xf32>
    %cst = arith.constant dense<0.000000e+00> : vector<32x128xf32>
    %5 = tpu.matmul %3, %4, %cst {dimension_numbers = #tpu.dot_dimension_numbers<[1], [0], [0], [1], [0, 0, 1, 1], [], []>} : vector<32x32xf32>, vector<32x128xf32>, vector<32x128xf32> -> vector<32x128xf32>
    %c0_4 = arith.constant 0 : index
    %c0_5 = arith.constant 0 : index
    %6 = vector.load %arg4[%c0_4, %c0_5] : memref<1x128xf32, #tpu.memory_space<vmem>>, vector<1x128xf32>
    %7 = vector.broadcast %6 : vector<1x128xf32> to vector<32x128xf32>
    %8 = arith.addf %5, %7 : vector<32x128xf32>
    %9 = arith.index_cast %arg1 : i32 to index
    %c0_6 = arith.constant 0 : index
    %c0_7 = arith.constant 0 : index
    %10 = vector.load %arg5[%9, %c0_6, %c0_7] : memref<1x32x128xf32, #tpu.memory_space<vmem>>, vector<1x32x128xf32>
    %11 = vector.shape_cast %10 : vector<1x32x128xf32> to vector<32x128xf32>
    %12 = vector.shape_cast %8 : vector<32x128xf32> to vector<1x32x128xf32>
    tpu.vector_store %arg5[%9, %c0_6, %c0_7], %12 {strides = array<i32>} : memref<1x32x128xf32, #tpu.memory_space<vmem>>, vector<1x32x128xf32>,
    %c0_8 = arith.constant 0 : index
    %c0_9 = arith.constant 0 : index
    %13 = vector.load %arg6[%c0_8, %c0_9] : memref<32x1xf32, #tpu.memory_space<vmem>>, vector<32x1xf32>
    %cst_10 = arith.constant dense<0xFF800000> : vector<32xf32>
    %14 = vector.multi_reduction <maximumf>, %8, %cst_10 [1] : vector<32x128xf32> to vector<32xf32>
    %15 = vector.shape_cast %14 : vector<32xf32> to vector<32x1xf32>
    %16 = arith.maximumf %13, %15 : vector<32x1xf32>
    %c0_11 = arith.constant 0 : index
    %c0_12 = arith.constant 0 : index
    %17 = vector.load %arg7[%c0_11, %c0_12] : memref<32x1xf32, #tpu.memory_space<vmem>>, vector<32x1xf32>
    %18 = arith.subf %13, %16 : vector<32x1xf32>
    %19 = math.exp %18 : vector<32x1xf32>
    %20 = arith.mulf %17, %19 : vector<32x1xf32>
    %21 = vector.broadcast %16 : vector<32x1xf32> to vector<32x128xf32>
    %22 = arith.subf %8, %21 : vector<32x128xf32>
    %23 = math.exp %22 : vector<32x128xf32>
    %cst_13 = arith.constant dense<0.000000e+00> : vector<32xf32>
    %24 = vector.multi_reduction <add>, %23, %cst_13 [1] : vector<32x128xf32> to vector<32xf32>
    %25 = vector.shape_cast %24 : vector<32xf32> to vector<32x1xf32>
    %26 = arith.addf %20, %25 : vector<32x1xf32>
    %c0_14 = arith.constant 0 : index
    %c0_15 = arith.constant 0 : index
    %27 = vector.load %arg7[%c0_14, %c0_15] : memref<32x1xf32, #tpu.memory_space<vmem>>, vector<32x1xf32>
    tpu.vector_store %arg7[%c0_14, %c0_15], %26 {strides = array<i32>} : memref<32x1xf32, #tpu.memory_space<vmem>>, vector<32x1xf32>,
    %c0_16 = arith.constant 0 : index
    %c0_17 = arith.constant 0 : index
    %28 = vector.load %arg6[%c0_16, %c0_17] : memref<32x1xf32, #tpu.memory_space<vmem>>, vector<32x1xf32>
    tpu.vector_store %arg6[%c0_16, %c0_17], %16 {strides = array<i32>} : memref<32x1xf32, #tpu.memory_space<vmem>>, vector<32x1xf32>,
    %c0_i32_18 = arith.constant 0 : i32
    %29 = arith.cmpi eq, %arg1, %c0_i32_18 : i32
    %30 = arith.extui %29 : i1 to i32
    %c0_i32_19 = arith.constant 0 : i32
    %31 = arith.cmpi ne, %30, %c0_i32_19 : i32
    scf.if %31 {
      %c0_20 = arith.constant 0 : index
      %c0_21 = arith.constant 0 : index
      %32 = vector.load %arg6[%c0_20, %c0_21] : memref<32x1xf32, #tpu.memory_space<vmem>>, vector<32x1xf32>
      %c0_22 = arith.constant 0 : index
      %c0_23 = arith.constant 0 : index
      %33 = vector.load %arg7[%c0_22, %c0_23] : memref<32x1xf32, #tpu.memory_space<vmem>>, vector<32x1xf32>
      %34 = math.log %33 : vector<32x1xf32>
      %35 = arith.addf %32, %34 : vector<32x1xf32>
      %c0_24 = arith.constant 0 : index
      %c0_25 = arith.constant 0 : index
      %c0_26 = arith.constant 0 : index
      %36 = vector.load %arg5[%c0_24, %c0_25, %c0_26] : memref<1x32x128xf32, #tpu.memory_space<vmem>>, vector<1x32x128xf32>
      %37 = vector.shape_cast %36 : vector<1x32x128xf32> to vector<32x128xf32>
      %38 = vector.broadcast %35 : vector<32x1xf32> to vector<32x128xf32>
      %39 = arith.subf %37, %38 : vector<32x128xf32>
      %c0_27 = arith.constant 0 : index
      %c0_28 = arith.constant 0 : index
      %c0_29 = arith.constant 0 : index
      %40 = vector.load %arg5[%c0_27, %c0_28, %c0_29] : memref<1x32x128xf32, #tpu.memory_space<vmem>>, vector<1x32x128xf32>
      %41 = vector.shape_cast %40 : vector<1x32x128xf32> to vector<32x128xf32>
      %42 = vector.shape_cast %39 : vector<32x128xf32> to vector<1x32x128xf32>
      tpu.vector_store %arg5[%c0_27, %c0_28, %c0_29], %42 {strides = array<i32>} : memref<1x32x128xf32, #tpu.memory_space<vmem>>, vector<1x32x128xf32>,
    } else {
    }
    return
  }
  func.func @transform_0(%arg0: i32, %arg1: i32) -> (i32, i32) {
    %c0_i32 = arith.constant 0 : i32
    %c0_i32_0 = arith.constant 0 : i32
    return %arg0, %c0_i32 : i32, i32
  }
  func.func @transform_1(%arg0: i32, %arg1: i32) -> (i32, i32) {
    %c0_i32 = arith.constant 0 : i32
    %c0_i32_0 = arith.constant 0 : i32
    return %c0_i32, %arg1 : i32, i32
  }
  func.func @transform_2(%arg0: i32, %arg1: i32) -> (i32, i32) {
    %c0_i32 = arith.constant 0 : i32
    %c0_i32_0 = arith.constant 0 : i32
    return %c0_i32, %arg1 : i32, i32
  }
  func.func @transform_3(%arg0: i32, %arg1: i32) -> (i32, i32, i32) {
    %c0_i32 = arith.constant 0 : i32
    %c0_i32_0 = arith.constant 0 : i32
    %c0_i32_1 = arith.constant 0 : i32
    return %c0_i32, %arg0, %c0_i32_0 : i32, i32, i32
  }
}

</mosaic_0001>

<llo_original>
// kernel: tpu_custom_call.1
$region0: #{tpu_custom_call.1}
  #allocation0 [shape = 'u32[]', space=smem, size = 0x4, offset = 0x4, fixed_abs, tag = 'smem constant byte address 0x4 - core index']
  #allocation1 [shape = 'u32[144,128]{1,0:T(1,128)}', space=vmem, size = 0x12000, scoped, tag = 'internal scratch']
  #allocation2 [shape = 'f32[32,1]{1,0:T(8,128)}', space=vmem, size = 0x4000, scoped, tag = 'scratch operand']
  #allocation3 [shape = 'f32[32,1]{1,0:T(8,128)}', space=vmem, size = 0x4000, scoped, tag = 'scratch operand']
  %s0 = inlined_call_operand.vmem [shape: f32[64,32], index: 0, kind: input, shape index: {}]
  %s1 = inlined_call_operand.vmem [shape: f32[32,128], index: 1, kind: input, shape index: {}]
  %s2 = inlined_call_operand.vmem [shape: f32[1,128], index: 2, kind: input, shape index: {}]
  %s3 = inlined_call_operand.hbm [shape: f32[1,64,128], index: 3, kind: output, shape index: {}]
  %s4 = sld [smem:[#allocation0]]
  $region53: #{tpu_custom_call.1} parent=0
    _
  %s6 = ssub.s32 1, %s4
  %s7 = scalar_select 0, %s6, %s4
  $region1: #{tpu_custom_call.1} parent=0
    #allocation4 [shape = 'u8[32768]{0}', space=vmem, size = 0x8000, scoped, tag = 'output window, operand 0']
    #allocation5 [shape = 's32[2]{0}', space=sflag, size = 0x8, scoped, tag = 'scoped memory for tpu_custom_call.1']
    %8 = vsyncpa [#allocation5], 0
    %s9 = scalar_lea.sflag [#allocation5], 1
    %10 = vsyncpa %s9, 0
    loop: start=0, step=1, limit=4
    $region2: #{tpu_custom_call.1} parent=1 // loop_pre_header
      _
    $region3: #{tpu_custom_call.1} parent=1 // loop_header
      %s12 = sphi 0, %s16
      %p13 = scmp.ge.s32.totalorder %s12, 4
      %s19 = sphi 0, %s31
      %s20 = sphi 0, %s27
      %s21 = sphi 0, %s19
      %s22 = sphi 0, %s20
      %s23 = sphi 0, %s21
      %s24 = sphi 0, %s22
      %s34 = sphi 0, %s36
      %s37 = sphi 0, %s34
      %s38 = sphi 0, %s37
      %s54 = sphi 0, %s38
      %s60 = sphi 0, %s62
      %s63 = sphi 0, %s60
      %s64 = sphi 0, %s63
      %s80 = sphi 0, %s64
      %s86 = sphi 0, %s88
      %s89 = sphi 0, %s86
      %s90 = sphi 0, %s89
      %s106 = sphi 0, %s90
      %s112 = sphi 0, %s114
      %s115 = sphi 0, %s112
      %s116 = sphi 0, %s115
      %s132 = sphi 0, %s116
    $region4: #{tpu_custom_call.1} parent=1 // loop_header_branch
      %15 = sbr.rel (%p13) target = $region8
    $region5: #{tpu_custom_call.1} parent=1 // loop_body
      %s17 = ssub.s32 %s12, 1
      %s18 = ssub.s32 %s12, 2
      %s25 = sadd.s32 1, %s20
      %p26 = scmp.ge.s32.totalorder %s25, 1
      %s27 = scalar_select %p26, 0, %s25
      %s28 = sadd.s32 1, %s19
      %s29 = scalar_select %p26, %s28, %s19
      %p30 = scmp.ge.s32.totalorder %s29, 2
      %s31 = scalar_select %p30, 0, %s29
      %s32 = ssub.s32 %s19, %s31
      %p33 = scmp.eq.s32.totalorder %s32, 0
      %s35 = sadd.s32 %s34, 1
      %s36 = scalar_select %p33, %s34, %s35
      %p39 = pneg %p33
      %p40 = scmp.eq.s32.totalorder %s12, 1
      %p41 = por %p39, %p40
      %p42 = scmp.ne.s32.totalorder %s34, %s37
      %p43 = scmp.eq.s32.totalorder %s12, 0
      %p44 = por %p42, %p43
      %p45 = scmp.ne.s32.totalorder %s34, %s37
      %p46 = scmp.eq.s32.totalorder %s17, 1
      %p47 = por %p45, %p46
      %p48 = scmp.ne.s32.totalorder %s37, %s38
      %p49 = scmp.eq.s32.totalorder %s17, 0
      %p50 = por %p48, %p49
      %p51 = scmp.ne.s32.totalorder %s37, %s38
      %p52 = scmp.eq.s32.totalorder %s18, 1
      %p53 = por %p51, %p52
      %p55 = scmp.ne.s32.totalorder %s38, %s54
      %p56 = scmp.eq.s32.totalorder %s18, 0
      %p57 = por %p55, %p56
      %s58 = ssub.s32 %s20, %s27
      %p59 = scmp.eq.s32.totalorder %s58, 0
      %s61 = sadd.s32 %s60, 1
      %s62 = scalar_select %p59, %s60, %s61
      %p65 = pneg %p59
      %p66 = scmp.eq.s32.totalorder %s12, 1
      %p67 = por %p65, %p66
      %p68 = scmp.ne.s32.totalorder %s60, %s63
      %p69 = scmp.eq.s32.totalorder %s12, 0
      %p70 = por %p68, %p69
      %p71 = scmp.ne.s32.totalorder %s60, %s63
      %p72 = scmp.eq.s32.totalorder %s17, 1
      %p73 = por %p71, %p72
      %p74 = scmp.ne.s32.totalorder %s63, %s64
      %p75 = scmp.eq.s32.totalorder %s17, 0
      %p76 = por %p74, %p75
      %p77 = scmp.ne.s32.totalorder %s63, %s64
      %p78 = scmp.eq.s32.totalorder %s18, 1
      %p79 = por %p77, %p78
      %p81 = scmp.ne.s32.totalorder %s64, %s80
      %p82 = scmp.eq.s32.totalorder %s18, 0
      %p83 = por %p81, %p82
      %s84 = ssub.s32 %s20, %s27
      %p85 = scmp.eq.s32.totalorder %s84, 0
      %s87 = sadd.s32 %s86, 1
      %s88 = scalar_select %p85, %s86, %s87
      %p91 = pneg %p85
      %p92 = scmp.eq.s32.totalorder %s12, 1
      %p93 = por %p91, %p92
      %p94 = scmp.ne.s32.totalorder %s86, %s89
      %p95 = scmp.eq.s32.totalorder %s12, 0
      %p96 = por %p94, %p95
      %p97 = scmp.ne.s32.totalorder %s86, %s89
      %p98 = scmp.eq.s32.totalorder %s17, 1
      %p99 = por %p97, %p98
      %p100 = scmp.ne.s32.totalorder %s89, %s90
      %p101 = scmp.eq.s32.totalorder %s17, 0
      %p102 = por %p100, %p101
      %p103 = scmp.ne.s32.totalorder %s89, %s90
      %p104 = scmp.eq.s32.totalorder %s18, 1
      %p105 = por %p103, %p104
      %p107 = scmp.ne.s32.totalorder %s90, %s106
      %p108 = scmp.eq.s32.totalorder %s18, 0
      %p109 = por %p107, %p108
      %s110 = ssub.s32 %s19, %s31
      %p111 = scmp.eq.s32.totalorder %s110, 0
      %s113 = sadd.s32 %s112, 1
      %s114 = scalar_select %p111, %s112, %s113
      %p117 = pneg %p111
      %p118 = scmp.eq.s32.totalorder %s12, 1
      %p119 = por %p117, %p118
      %p120 = scmp.ne.s32.totalorder %s112, %s115
      %p121 = scmp.eq.s32.totalorder %s12, 0
      %p122 = por %p120, %p121
      %p123 = scmp.ne.s32.totalorder %s112, %s115
      %p124 = scmp.eq.s32.totalorder %s17, 1
      %p125 = por %p123, %p124
      %p126 = scmp.ne.s32.totalorder %s115, %s116
      %p127 = scmp.eq.s32.totalorder %s17, 0
      %p128 = por %p126, %p127
      %p129 = scmp.ne.s32.totalorder %s115, %s116
      %p130 = scmp.eq.s32.totalorder %s18, 1
      %p131 = por %p129, %p130
      %p133 = scmp.ne.s32.totalorder %s116, %s132
      %p134 = scmp.eq.s32.totalorder %s18, 0
      %p135 = por %p133, %p134
      %p136 = scmp.le.s32.totalorder 1, %s12
      %p137 = scmp.lt.s32.totalorder %s12, 3
      %p138 = pnand %p136, %p137
      %p139 = pneg %p138
      // Predicated region
      $region9: #{tpu_custom_call.1} parent=5 // pred_check
        _
      $region10: #{tpu_custom_call.1} parent=5 // pred_check_branch
        %141 = sbr.rel (%p138) target = $region12
      $region11: #{tpu_custom_call.1} parent=5 // pred_region
        %s142 = ssub.s32 %s12, 1
        // Predicated region
        $region13: #{tpu_custom_call.1} parent=11 // pred_check
          %p143 = pneg %p76
        $region14: #{tpu_custom_call.1} parent=11 // pred_check_branch
          %145 = sbr.rel (%p143) target = $region16
        $region15: #{tpu_custom_call.1} parent=11 // pred_region
          %p146 = scmp.lt.s32.totalorder %s22, 0
          %s147 = scalar_select %p146, %s22, 0
          %s148 = smul.addr %s147, 8
          %s149 = scalar_lea.vmem %s1, %s148
        $region16: #{tpu_custom_call.1} parent=11 // pred_fallthru
          _
        // Predicated region
        $region17: #{tpu_custom_call.1} parent=11 // pred_check
          %p150 = pneg %p102
        $region18: #{tpu_custom_call.1} parent=11 // pred_check_branch
          %152 = sbr.rel (%p150) target = $region20
        $region19: #{tpu_custom_call.1} parent=11 // pred_region
          %p153 = scmp.lt.s32.totalorder %s22, 0
          %s154 = scalar_select %p153, %s22, 0
          %s155 = scalar_lea.vmem %s2, %s154
        $region20: #{tpu_custom_call.1} parent=11 // pred_fallthru
          _
      $region12: #{tpu_custom_call.1} parent=5 // pred_fallthru
        _
      %p156 = scmp.lt.s32.totalorder %s12, 2
      // Predicated region
      $region21: #{tpu_custom_call.1} parent=5 // pred_check
        %p157 = pneg %p156
      $region22: #{tpu_custom_call.1} parent=5 // pred_check_branch
        %159 = sbr.rel (%p157) target = $region24
      $region23: #{tpu_custom_call.1} parent=5 // pred_region
        // Predicated region
        $region25: #{tpu_custom_call.1} parent=23 // pred_check
          %p160 = pneg %p44
        $region26: #{tpu_custom_call.1} parent=23 // pred_check_branch
          %162 = sbr.rel (%p160) target = $region28
        $region27: #{tpu_custom_call.1} parent=23 // pred_region
          %s163 = smul.u32 4, %s19
          %p164 = scmp.lt.s32.totalorder %s163, 7
          %s165 = scalar_select %p164, %s163, 7
          %s166 = smul.addr %s165, 8
          %s167 = scalar_lea.vmem %s0, %s166
          %s168 = smul.u32 4, %s19
        $region28: #{tpu_custom_call.1} parent=23 // pred_fallthru
          _
      $region24: #{tpu_custom_call.1} parent=5 // pred_fallthru
        _
      %p169 = scmp.le.s32.totalorder 1, %s12
      %p170 = scmp.lt.s32.totalorder %s12, 3
      %p171 = pnand %p169, %p170
      %p172 = pneg %p171
      // Predicated region
      $region29: #{tpu_custom_call.1} parent=5 // pred_check
        _
      $region30: #{tpu_custom_call.1} parent=5 // pred_check_branch
        %174 = sbr.rel (%p171) target = $region32
      $region31: #{tpu_custom_call.1} parent=5 // pred_region
        %s175 = ssub.s32 %s12, 1
        %s176 = smul.u32 4, %s21
        %p177 = scmp.lt.s32.totalorder %s176, 7
        %s178 = scalar_select %p177, %s176, 7
        %s179 = smul.addr %s178, 8
        %s180 = scalar_lea.vmem %s0, %s179
        %p181 = pneg %p50
        %p182 = pneg %p47
        %p183 = scmp.lt.s32.totalorder %s22, 0
        %s184 = scalar_select %p183, %s22, 0
        %s185 = smul.addr %s184, 8
        %s186 = scalar_lea.vmem %s1, %s185
        %p187 = pneg %p76
        %p188 = pneg %p73
        %p189 = scmp.lt.s32.totalorder %s22, 0
        %s190 = scalar_select %p189, %s22, 0
        %s191 = scalar_lea.vmem %s2, %s190
        %p192 = pneg %p102
        %p193 = pneg %p99
        %p194 = pneg %p128
        %p195 = pneg %p125
        %s196 = sand.u32 %s115, 1
        %s197 = scalar_lea.sflag [#allocation5], %s196
        %s198 = sand.u32 %s115, 1
        %s199 = smul.addr %s198, 32
        %s200 = scalar_lea.vmem [#allocation4], %s199
        %s201 = smul.u32 4, %s21
        %p202 = scmp.lt.s32.totalorder %s201, 7
        %s203 = scalar_select %p202, %s201, 7
        %s204 = smul.addr %s203, 8
        %s205 = scalar_lea.vmem %s0, %s204
        %s206 = smul.u32 4, %s21
        %p207 = scmp.lt.s32.totalorder %s22, 0
        %s208 = scalar_select %p207, %s22, 0
        %s209 = smul.addr %s208, 8
        %s210 = scalar_lea.vmem %s1, %s209
        %p211 = scmp.lt.s32.totalorder %s22, 0
        %s212 = scalar_select %p211, %s22, 0
        %s213 = scalar_lea.vmem %s2, %s212
        %s214 = smul.u32 4, %s21
        %p215 = scmp.eq.s32.totalorder %s22, 0
        // Predicated region
        $region33: #{tpu_custom_call.1} parent=31 // pred_check
          %p216 = pneg %p215
        $region34: #{tpu_custom_call.1} parent=31 // pred_check_branch
          %218 = sbr.rel (%p216) target = $region36
        $region35: #{tpu_custom_call.1} parent=31 // pred_region
          %vm219 = vcmask 7168
          %220 = vst.msk [vmem:[#allocation2] sm:$0xff] %vm219, -inf
          %221 = vst.msk [vmem:[#allocation2 + $0x8] sm:$0xff] %vm219, -inf
          %222 = vst.msk [vmem:[#allocation2 + $0x10] sm:$0xff] %vm219, -inf
          %223 = vst.msk [vmem:[#allocation2 + $0x18] sm:$0xff] %vm219, -inf
          %224 = vst.msk [vmem:[#allocation3] sm:$0xff] %vm219, 0.0
          %225 = vst.msk [vmem:[#allocation3 + $0x8] sm:$0xff] %vm219, 0.0
          %226 = vst.msk [vmem:[#allocation3 + $0x10] sm:$0xff] %vm219, 0.0
          %227 = vst.msk [vmem:[#allocation3 + $0x18] sm:$0xff] %vm219, 0.0
        $region36: #{tpu_custom_call.1} parent=31 // pred_fallthru
          _
        %v228 = vld [vmem:[%s205] sm:$0xff]
        %v229 = vld [vmem:[%s205 + $0x8] sm:$0xff]
        %v230 = vld [vmem:[%s205 + $0x10] sm:$0xff]
        %v231 = vld [vmem:[%s205 + $0x18] sm:$0xff]
        %v232 = vld [vmem:[%s210] sm:$0xff]
        %v233 = vld [vmem:[%s210 + $0x8] sm:$0xff]
        %v234 = vld [vmem:[%s210 + $0x10] sm:$0xff]
        %v235 = vld [vmem:[%s210 + $0x18] sm:$0xff]
        %v236 = vld [vmem:[%s213] sm:$0x1]
        %v238 = vlaneseq
        %v239 = vshrl.u32 %v238, 7
        %v240 = vsub.s32 0, %v239
        %v241 = vrot.slane %v236, %v240
        %vm243 = vcmask 261120
        %v245 = vsel %vm243, %v228, 0
        %v248 = vsel %vm243, %v229, 0
        %v251 = vsel %vm243, %v230, 0
        %v254 = vsel %vm243, %v231, 0
        %256 = vmatprep.subr.mxu0 0.0
        %257 = vmatpush1.msra.mxu0 0.0
        %258 = vmatprep.subr.mxu0 0.0
        %259 = vmatpush1.msra.mxu0 0.0
        %260 = vmatprep.subr.mxu0 0.0
        %261 = vmatpush1.msra.mxu0 0.0
        %262 = vmatprep.subr.mxu0 0.0
        %263 = vmatpush1.msra.mxu0 0.0
        %264 = vmatprep.subr.mxu0 0.0
        %265 = vmatpush1.msra.mxu0 0.0
        %266 = vmatprep.subr.mxu0 0.0
        %267 = vmatpush1.msra.mxu0 0.0
        %268 = vmatprep.subr.mxu0 0.0
        %269 = vmatpush1.msra.mxu0 0.0
        %270 = vmatprep.subr.mxu0 0.0
        %271 = vmatpush1.msra.mxu0 0.0
        %272 = vmatprep.subr.mxu0 0.0
        %273 = vmatpush1.msra.mxu0 0.0
        %274 = vmatprep.subr.mxu0 0.0
        %275 = vmatpush1.msra.mxu0 0.0
        %276 = vmatprep.subr.mxu0 0.0
        %277 = vmatpush1.msra.mxu0 0.0
        %278 = vmatprep.subr.mxu0 0.0
        %279 = vmatpush1.msra.mxu0 0.0
        %280 = vmatprep.subr.mxu0 0.0
        %281 = vmatpush1.msra.mxu0 %v235
        %282 = vmatprep.subr.mxu0 0.0
        %283 = vmatpush1.msra.mxu0 %v234
        %284 = vmatprep.subr.mxu0 0.0
        %285 = vmatpush1.msra.mxu0 %v233
        %286 = vmatprep.subr.mxu0 0.0
        %287 = vmatpush1.msra.mxu0 %v232
        %288 = vmatprep.subr.mxu0 0.0
        %289 = vmatpush2.msra.mxu0 0.0
        %290 = vmatprep.subr.mxu0 0.0
        %291 = vmatpush2.msra.mxu0 0.0
        %292 = vmatprep.subr.mxu0 0.0
        %293 = vmatpush2.msra.mxu0 0.0
        %294 = vmatprep.subr.mxu0 0.0
        %295 = vmatpush2.msra.mxu0 0.0
        %296 = vmatprep.subr.mxu0 0.0
        %297 = vmatpush2.msra.mxu0 0.0
        %298 = vmatprep.subr.mxu0 0.0
        %299 = vmatpush2.msra.mxu0 0.0
        %300 = vmatprep.subr.mxu0 0.0
        %301 = vmatpush2.msra.mxu0 0.0
        %302 = vmatprep.subr.mxu0 0.0
        %303 = vmatpush2.msra.mxu0 0.0
        %304 = vmatprep.subr.mxu0 0.0
        %305 = vmatpush2.msra.mxu0 0.0
        %306 = vmatprep.subr.mxu0 0.0
        %307 = vmatpush2.msra.mxu0 0.0
        %308 = vmatprep.subr.mxu0 0.0
        %309 = vmatpush2.msra.mxu0 0.0
        %310 = vmatprep.subr.mxu0 0.0
        %311 = vmatpush2.msra.mxu0 0.0
        %312 = vmatprep.subr.mxu0 0.0
        %313 = vmatpush2.msra.mxu0 0.0
        %314 = vmatprep.subr.mxu0 0.0
        %315 = vmatpush2.msra.mxu0 0.0
        %316 = vmatprep.subr.mxu0 0.0
        %317 = vmatpush2.msra.mxu0 0.0
        %318 = vmatprep.subr.mxu0 0.0
        %319 = vmatpush2.msra.mxu0 0.0
        %320 = vmatprep.mubr.f32.mxu0 0.0
        %321 = vmatmul.mubr.f32.gmra.mxu0 %v245
        %v322 = vpop.f32.mrf.mxu0
        %v323 = vadd.f32 %v241, %v322
        %v324 = vpop.f32.mrf.mxu0
        %325 = vmatprep.mubr.f32.mxu0 0.0
        %326 = vmatmul.mubr.f32.gmra.mxu0 %v248
        %v327 = vpop.f32.mrf.mxu0
        %v328 = vadd.f32 %v241, %v327
        %v329 = vpop.f32.mrf.mxu0
        %330 = vmatprep.mubr.f32.mxu0 0.0
        %331 = vmatmul.mubr.f32.gmra.mxu0 %v251
        %v332 = vpop.f32.mrf.mxu0
        %v333 = vadd.f32 %v241, %v332
        %v334 = vpop.f32.mrf.mxu0
        %335 = vmatprep.mubr.f32.mxu0 0.0
        %336 = vmatmul.mubr.f32.gmra.mxu0 %v254
        %v337 = vpop.f32.mrf.mxu0
        %v338 = vadd.f32 %v241, %v337
        %v339 = vpop.f32.mrf.mxu0
        %340 = vdwg.mxu0
        %s341 = smul.u32 %s22, 32
        %s342 = scalar_lea.vmem %s200, %s341 [#allocation4]
        %343 = vst [vmem:[%s342] sm:$0xff] %v323
        %344 = vst [vmem:[%s342 + $0x8] sm:$0xff] %v328
        %345 = vst [vmem:[%s342 + $0x10] sm:$0xff] %v333
        %346 = vst [vmem:[%s342 + $0x18] sm:$0xff] %v338
        %v347 = vld [vmem:[#allocation2] sm:$0xff]
        %v348 = vld [vmem:[#allocation2 + $0x8] sm:$0xff]
        %v349 = vld [vmem:[#allocation2 + $0x10] sm:$0xff]
        %v350 = vld [vmem:[#allocation2 + $0x18] sm:$0xff]
        %351 = vmax.xlane.f32.xlu0 %v323
        %v352 = vpop.xlane.xlu0 %351
        %353 = vmax.xlane.f32.xlu0 %v328
        %v354 = vpop.xlane.xlu0 %353
        %355 = vmax.xlane.f32.xlu0 %v333
        %v356 = vpop.xlane.xlu0 %355
        %357 = vmax.xlane.f32.xlu0 %v338
        %v358 = vpop.xlane.xlu0 %357
        %v359 = vmax.f32 %v347, %v352
        %v360 = vmax.f32 %v348, %v354
        %v361 = vmax.f32 %v349, %v356
        %v362 = vmax.f32 %v350, %v358
        %v363 = vld [vmem:[#allocation3] sm:$0xff]
        %v364 = vld [vmem:[#allocation3 + $0x8] sm:$0xff]
        %v365 = vld [vmem:[#allocation3 + $0x10] sm:$0xff]
        %v366 = vld [vmem:[#allocation3 + $0x18] sm:$0xff]
        %v367 = vsub.f32 %v347, %v359
        %v368 = vsub.f32 %v348, %v360
        %v369 = vsub.f32 %v349, %v361
        %v370 = vsub.f32 %v350, %v362
        %v371 = vmul.f32 %v367, 1.442695
        %v372 = vpow.pop %v371
        %v373 = vmul.f32 %v368, 1.442695
        %v374 = vpow.pop %v373
        %v375 = vmul.f32 %v369, 1.442695
        %v376 = vpow.pop %v375
        %v377 = vmul.f32 %v370, 1.442695
        %v378 = vpow.pop %v377
        %v379 = vmul.f32 %v363, %v372
        %v380 = vmul.f32 %v364, %v374
        %v381 = vmul.f32 %v365, %v376
        %v382 = vmul.f32 %v366, %v378
        %384 = vset.pattern.permute.xlu0 0
        %385 = vperm.xlu0 %384, %v359
        %v386 = vpop.permute.xlu0 %385
        %389 = vset.pattern.permute.xlu0 0
        %390 = vperm.xlu0 %389, %v360
        %v391 = vpop.permute.xlu0 %390
        %394 = vset.pattern.permute.xlu0 0
        %395 = vperm.xlu0 %394, %v361
        %v396 = vpop.permute.xlu0 %395
        %399 = vset.pattern.permute.xlu0 0
        %400 = vperm.xlu0 %399, %v362
        %v401 = vpop.permute.xlu0 %400
        %v403 = vsub.f32 %v323, %v386
        %v404 = vsub.f32 %v328, %v391
        %v405 = vsub.f32 %v333, %v396
        %v406 = vsub.f32 %v338, %v401
        %v407 = vmul.f32 %v403, 1.442695
        %v408 = vpow.pop %v407
        %v409 = vmul.f32 %v404, 1.442695
        %v410 = vpow.pop %v409
        %v411 = vmul.f32 %v405, 1.442695
        %v412 = vpow.pop %v411
        %v413 = vmul.f32 %v406, 1.442695
        %v414 = vpow.pop %v413
        %415 = vadd.xlane.f32.xlu0 %v408
        %v416 = vpop.xlane.xlu0 %415
        %417 = vadd.xlane.f32.xlu0 %v410
        %v418 = vpop.xlane.xlu0 %417
        %419 = vadd.xlane.f32.xlu0 %v412
        %v420 = vpop.xlane.xlu0 %419
        %421 = vadd.xlane.f32.xlu0 %v414
        %v422 = vpop.xlane.xlu0 %421
        %v423 = vadd.f32 %v379, %v416
        %v424 = vadd.f32 %v380, %v418
        %v425 = vadd.f32 %v381, %v420
        %v426 = vadd.f32 %v382, %v422
        %vm427 = vcmask 7168
        %428 = vst.msk [vmem:[#allocation3] sm:$0xff] %vm427, %v423
        %429 = vst.msk [vmem:[#allocation3 + $0x8] sm:$0xff] %vm427, %v424
        %430 = vst.msk [vmem:[#allocation3 + $0x10] sm:$0xff] %vm427, %v425
        %431 = vst.msk [vmem:[#allocation3 + $0x18] sm:$0xff] %vm427, %v426
        %432 = vst.msk [vmem:[#allocation2] sm:$0xff] %vm427, %v359
        %433 = vst.msk [vmem:[#allocation2 + $0x8] sm:$0xff] %vm427, %v360
        %434 = vst.msk [vmem:[#allocation2 + $0x10] sm:$0xff] %vm427, %v361
        %435 = vst.msk [vmem:[#allocation2 + $0x18] sm:$0xff] %vm427, %v362
        // Predicated region
        $region37: #{tpu_custom_call.1} parent=31 // pred_check
          %p436 = pneg %p215
        $region38: #{tpu_custom_call.1} parent=31 // pred_check_branch
          %438 = sbr.rel (%p436) target = $region40
        $region39: #{tpu_custom_call.1} parent=31 // pred_region
          %v439 = vld [vmem:[#allocation2] sm:$0xff]
          %v440 = vld [vmem:[#allocation2 + $0x8] sm:$0xff]
          %v441 = vld [vmem:[#allocation2 + $0x10] sm:$0xff]
          %v442 = vld [vmem:[#allocation2 + $0x18] sm:$0xff]
          %v443 = vld [vmem:[#allocation3] sm:$0xff]
          %v444 = vld [vmem:[#allocation3 + $0x8] sm:$0xff]
          %v445 = vld [vmem:[#allocation3 + $0x10] sm:$0xff]
          %v446 = vld [vmem:[#allocation3 + $0x18] sm:$0xff]
          %v447 = vlog2.pop %v443
          %v448 = vmul.f32 %v447, 0.6931472
          %v449 = vlog2.pop %v444
          %v450 = vmul.f32 %v449, 0.6931472
          %v451 = vlog2.pop %v445
          %v452 = vmul.f32 %v451, 0.6931472
          %v453 = vlog2.pop %v446
          %v454 = vmul.f32 %v453, 0.6931472
          %v455 = vadd.f32 %v439, %v448
          %v456 = vadd.f32 %v440, %v450
          %v457 = vadd.f32 %v441, %v452
          %v458 = vadd.f32 %v442, %v454
          %v459 = vld [vmem:[%s200] sm:$0xff]
          %v460 = vld [vmem:[%s200 + $0x8] sm:$0xff]
          %v461 = vld [vmem:[%s200 + $0x10] sm:$0xff]
          %v462 = vld [vmem:[%s200 + $0x18] sm:$0xff]
          %464 = vset.pattern.permute.xlu0 0
          %465 = vperm.xlu0 %464, %v455
          %v466 = vpop.permute.xlu0 %465
          %469 = vset.pattern.permute.xlu0 0
          %470 = vperm.xlu0 %469, %v456
          %v471 = vpop.permute.xlu0 %470
          %474 = vset.pattern.permute.xlu0 0
          %475 = vperm.xlu0 %474, %v457
          %v476 = vpop.permute.xlu0 %475
          %479 = vset.pattern.permute.xlu0 0
          %480 = vperm.xlu0 %479, %v458
          %v481 = vpop.permute.xlu0 %480
          %v483 = vsub.f32 %v459, %v466
          %v484 = vsub.f32 %v460, %v471
          %v485 = vsub.f32 %v461, %v476
          %v486 = vsub.f32 %v462, %v481
          %487 = vst [vmem:[%s200] sm:$0xff] %v483
          %488 = vst [vmem:[%s200 + $0x8] sm:$0xff] %v484
          %489 = vst [vmem:[%s200 + $0x10] sm:$0xff] %v485
          %490 = vst [vmem:[%s200 + $0x18] sm:$0xff] %v486
        $region40: #{tpu_custom_call.1} parent=31 // pred_fallthru
          _
        %s491 = sand.u32 %s115, 1
        %s492 = scalar_lea.sflag [#allocation5], %s491
        %s493 = sand.u32 %s115, 1
        %s494 = smul.addr %s493, 32
        %s495 = scalar_lea.vmem [#allocation4], %s494
        // Predicated region
        $region41: #{tpu_custom_call.1} parent=31 // pred_check
          %p496 = pneg %p125
        $region42: #{tpu_custom_call.1} parent=31 // pred_check_branch
          %498 = sbr.rel (%p496) target = $region44
        $region43: #{tpu_custom_call.1} parent=31 // pred_region
          %s499 = smul.u32 4, %s21
          %s501 = ssub.s32 512, 512
          %502 = vsyncadd %s492, %s501
          %s503 = smul.addr %s499, 128
          %s504 = scalar_lea.hbm %s3, %s503
          %s505 = sshll.u32 %s495, 4
          %s506 = int_to_ptr.vmem [resolvable:$true] %s505
          %511 = dma.vmem_to_hbm [thread:$0]  %s506, 512, %s504, %s492, 128, 128, 8
        $region44: #{tpu_custom_call.1} parent=31 // pred_fallthru
          _
      $region32: #{tpu_custom_call.1} parent=5 // pred_fallthru
        _
      %p512 = scmp.le.s32.totalorder 2, %s12
      // Predicated region
      $region45: #{tpu_custom_call.1} parent=5 // pred_check
        %p513 = pneg %p512
      $region46: #{tpu_custom_call.1} parent=5 // pred_check_branch
        %515 = sbr.rel (%p513) target = $region48
      $region47: #{tpu_custom_call.1} parent=5 // pred_region
        %s516 = ssub.s32 %s12, 2
        // Predicated region
        $region49: #{tpu_custom_call.1} parent=47 // pred_check
          %p517 = pneg %p131
        $region50: #{tpu_custom_call.1} parent=47 // pred_check_branch
          %519 = sbr.rel (%p517) target = $region52
        $region51: #{tpu_custom_call.1} parent=47 // pred_region
          %s520 = sand.u32 %s116, 1
          %s521 = scalar_lea.sflag [#allocation5], %s520
          %s522 = sand.u32 %s116, 1
          %s523 = smul.addr %s522, 32
          %s524 = scalar_lea.vmem [#allocation4], %s523
          %525 = dma.done %s521, 512
        $region52: #{tpu_custom_call.1} parent=47 // pred_fallthru
          _
      $region48: #{tpu_custom_call.1} parent=5 // pred_fallthru
        _
    $region6: #{tpu_custom_call.1} parent=1 // loop_footer
      %s16 = sadd.s32 1, %s12
    $region7: #{tpu_custom_call.1} parent=1 // loop_footer_branch
      %11 = sbr.rel target = $region3
    $region8: #{tpu_custom_call.1} parent=1 // loop_exit
      _
    %526 = vsyncpa [#allocation5], 1
    %s527 = scalar_lea.sflag [#allocation5], 1
    %528 = vsyncpa %s527, 1

</llo_original>
